<compile_context>
chip_gen: v6e
topology: v6e:2x2x1
jax: 0.10.0
libtpu: 0.0.40
codegen_flags: <defaults>
</compile_context>

<pallas_src>
import jax
import jax.numpy as jnp
from jax.experimental import pallas as pl
from jax.experimental.pallas import tpu as pltpu


def fused_linear_residual_kernel(x_ref, w_ref, o_ref, xpad_ref):
    """o = x @ W_eff_T (residual folded into W); x padded to lanes in-kernel."""
    d = x_ref.shape[1]
    # Stage x into a zeroed, lane-aligned (B, Dp) VMEM buffer.  Padded lanes
    # multiply zero-padded W rows, so they contribute nothing.
    xpad_ref[...] = jnp.zeros_like(xpad_ref)
    xpad_ref[:, :d] = x_ref[...]
    # Single MXU matmul on aligned tiles, f32 accumulation.
    res = jnp.dot(xpad_ref[...], w_ref[...], preferred_element_type=jnp.float32)
    # Write only the valid output lanes directly (one masked vst).
    o_ref[...] = res[:, : o_ref.shape[1]]


def prepare_weights(w0, w1, lane=128):
    """One-time offline prep (cache the result for inference).

    w0, w1: PyTorch-style (out_features, in_features) weights of the two
    bias-free Linears.  Returns W_eff_T, zero-padded to a multiple of `lane`,
    such that  l1(l0(x)) + x == x_padded @ W_eff_T  (on the original columns).
    """
    d = w0.shape[0]
    # W_eff_T[b, a] = sum_k w0[k, b] * w1[a, k]  ==  ((w1 @ w0) + I).T
    # dot_general avoids materializing any transpose.
    w_eff_t = jax.lax.dot_general(
        w0, w1, dimension_numbers=(((0,), (1,)), ((), ())),
        preferred_element_type=jnp.float32,
    ) + jnp.eye(d, dtype=jnp.float32)
    d_pad = pl.cdiv(d, lane) * lane
    if d_pad != d:
        # Padded rows/cols are exactly zero (f32), so padded x lanes contribute
        # nothing and padded output lanes are never stored anyway.
        w_eff_t = jnp.pad(w_eff_t, ((0, d_pad - d), (0, d_pad - d)))
    return w_eff_t


@jax.jit
def custom_model_forward(x, w_eff_t_pad):
    """x: (B, D) float32; w_eff_t_pad: (Dp, Dp) from prepare_weights."""
    b, d = x.shape
    d_pad = w_eff_t_pad.shape[0]
    return pl.pallas_call(
        fused_linear_residual_kernel,
        out_shape=jax.ShapeDtypeStruct((b, d), x.dtype),
        # No grid: single invocation, whole arrays resident in VMEM.
        in_specs=[
            pl.BlockSpec(memory_space=pltpu.MemorySpace.VMEM),
            pl.BlockSpec(memory_space=pltpu.MemorySpace.VMEM),
        ],
        out_specs=pl.BlockSpec(memory_space=pltpu.MemorySpace.VMEM),
        scratch_shapes=[pltpu.VMEM((b, d_pad), jnp.float32)],
    )(x, w_eff_t_pad)


if __name__ == "__main__":
    B, D = 8, 100  # matches x = torch.rand((8, 100)), CustomModel(size=100)
    key = jax.random.PRNGKey(0)
    kx, k0, k1 = jax.random.split(key, 3)

    x = jax.random.uniform(kx, (B, D), dtype=jnp.float32)
    # Deterministic init mimicking torch.nn.Linear's kaiming-uniform range.
    bound = 1.0 / (D ** 0.5)
    w0 = jax.random.uniform(k0, (D, D), dtype=jnp.float32, minval=-bound, maxval=bound)
    w1 = jax.random.uniform(k1, (D, D), dtype=jnp.float32, minval=-bound, maxval=bound)

    # One-time weight prep (would be cached across inference calls).
    w_eff_t_pad = prepare_weights(w0, w1)
    jax.block_until_ready(w_eff_t_pad)

    out = custom_model_forward(x, w_eff_t_pad)
    jax.block_until_ready(out)

    # Sanity check against a plain-JAX reference of the PyTorch forward.
    ref = (x @ w0.T) @ w1.T + x
    assert out.shape == (B, D)
    assert jnp.allclose(out, ref, atol=1e-4, rtol=1e-4)

    print("KERNEL_OK")
</pallas_src>

<mosaic_0001>
module attributes {stable_mosaic.version = 11 : i64} {
  func.func @fused_linear_residual_kernel(%arg0: memref<8x100xf32, #tpu.memory_space<vmem>>, %arg1: memref<128x128xf32, #tpu.memory_space<vmem>>, %arg2: memref<8x100xf32, #tpu.memory_space<vmem>>, %arg3: memref<8x128xf32, #tpu.memory_space<vmem>>) attributes {dimension_semantics = [], scalar_prefetch = 0 : i64, scratch_operands = 1 : i64, tpu.core_type = #tpu.core_type<tc>} {
    %cst = arith.constant 0.000000e+00 : f32
    %0 = vector.broadcast %cst : f32 to vector<8x128xf32>
    %c0 = arith.constant 0 : index
    %c0_0 = arith.constant 0 : index
    %1 = vector.load %arg3[%c0, %c0_0] : memref<8x128xf32, #tpu.memory_space<vmem>>, vector<8x128xf32>
    tpu.vector_store %arg3[%c0, %c0_0], %0 {strides = array<i32>} : memref<8x128xf32, #tpu.memory_space<vmem>>, vector<8x128xf32>,
    %c0_1 = arith.constant 0 : index
    %c0_2 = arith.constant 0 : index
    %2 = vector.load %arg0[%c0_1, %c0_2] : memref<8x100xf32, #tpu.memory_space<vmem>>, vector<8x100xf32>
    %c0_3 = arith.constant 0 : index
    %c0_4 = arith.constant 0 : index
    %3 = vector.load %arg3[%c0_3, %c0_4] : memref<8x128xf32, #tpu.memory_space<vmem>>, vector<8x100xf32>
    tpu.vector_store %arg3[%c0_3, %c0_4], %2 {strides = array<i32>} : memref<8x128xf32, #tpu.memory_space<vmem>>, vector<8x100xf32>,
    %c0_5 = arith.constant 0 : index
    %c0_6 = arith.constant 0 : index
    %4 = vector.load %arg3[%c0_5, %c0_6] : memref<8x128xf32, #tpu.memory_space<vmem>>, vector<8x128xf32>
    %c0_7 = arith.constant 0 : index
    %c0_8 = arith.constant 0 : index
    %5 = vector.load %arg1[%c0_7, %c0_8] : memref<128x128xf32, #tpu.memory_space<vmem>>, vector<128x128xf32>
    %cst_9 = arith.constant dense<0.000000e+00> : vector<8x128xf32>
    %6 = tpu.matmul %4, %5, %cst_9 {dimension_numbers = #tpu.dot_dimension_numbers<[1], [0], [0], [1], [0, 0, 1, 1], [], []>} : vector<8x128xf32>, vector<128x128xf32>, vector<8x128xf32> -> vector<8x128xf32>
    %7 = vector.extract_strided_slice %6 {offsets = [0, 0], sizes = [8, 100], strides = [1, 1]} : vector<8x128xf32> to vector<8x100xf32>
    %c0_10 = arith.constant 0 : index
    %c0_11 = arith.constant 0 : index
    %8 = vector.load %arg2[%c0_10, %c0_11] : memref<8x100xf32, #tpu.memory_space<vmem>>, vector<8x100xf32>
    tpu.vector_store %arg2[%c0_10, %c0_11], %7 {strides = array<i32>} : memref<8x100xf32, #tpu.memory_space<vmem>>, vector<8x100xf32>,
    return
  }
}

</mosaic_0001>

<llo_original>
// kernel: custom_model_forward.1
$region0: #{custom_model_forward.1}
  #allocation0 [shape = 'u32[]', space=smem, size = 0x4, offset = 0x4, fixed_abs, tag = 'smem constant byte address 0x4 - core index']
  #allocation1 [shape = 'u32[144,128]{1,0:T(1,128)}', space=vmem, size = 0x12000, scoped, tag = 'internal scratch']
  #allocation2 [shape = 'f32[8,128]{1,0:T(8,128)}', space=vmem, size = 0x1000, scoped, tag = 'scratch operand']
  %s0 = inlined_call_operand.hbm [shape: f32[8,100], index: 0, kind: input, shape index: {}]
  %s1 = inlined_call_operand.hbm [shape: f32[128,128], index: 1, kind: input, shape index: {}]
  %s2 = inlined_call_operand.hbm [shape: f32[8,100], index: 2, kind: output, shape index: {}]
  %s3 = sld [smem:[#allocation0]]
  $region26: #{custom_model_forward.1} parent=0
    _
  %s5 = ssub.s32 1, %s3
  %s6 = scalar_select 0, %s5, %s3
  $region1: #{custom_model_forward.1} parent=0
    #allocation3 [shape = 'u8[4096]{0}', space=vmem, size = 0x1000, scoped, tag = 'input window, operand 0, single buffered']
    #allocation4 [shape = 's32[1]{0}', space=sflag, size = 0x4, scoped, tag = 'scoped memory for custom_model_forward.1']
    #allocation5 [shape = 's32[1]{0}', space=sflag, size = 0x4, scoped, tag = 'scoped memory for custom_model_forward.1']
    #allocation6 [shape = 'u8[65536]{0}', space=vmem, size = 0x10000, scoped, tag = 'input window, operand 1, single buffered']
    #allocation7 [shape = 's32[1]{0}', space=sflag, size = 0x4, scoped, tag = 'scoped memory for custom_model_forward.1']
    #allocation8 [shape = 'u8[4096]{0}', space=vmem, size = 0x1000, scoped, tag = 'output window, operand 0, single buffered']
    %7 = vsyncpa [#allocation4], 0
    %8 = vsyncpa [#allocation7], 0
    %9 = vsyncpa [#allocation5], 0
    // Predicated region
    $region2: #{custom_model_forward.1} parent=1 // pred_check
      _
    $region3: #{custom_model_forward.1} parent=1 // pred_check_branch
      %11 = sbr.rel (0) target = $region5
    $region4: #{custom_model_forward.1} parent=1 // pred_region
      %s13 = ssub.s32 128, 128
      %14 = vsyncadd [#allocation4], %s13
      %s16 = sshll.u32 [#allocation3], 4
      %s17 = int_to_ptr.vmem [resolvable:$true] %s16
      %19 = dma.hbm_to_vmem [thread:$0]  %s0, 128, %s17, [#allocation4]
    $region5: #{custom_model_forward.1} parent=1 // pred_fallthru
      _
    // Predicated region
    $region6: #{custom_model_forward.1} parent=1 // pred_check
      _
    $region7: #{custom_model_forward.1} parent=1 // pred_check_branch
      %21 = sbr.rel (0) target = $region9
    $region8: #{custom_model_forward.1} parent=1 // pred_region
      %s23 = ssub.s32 2048, 2048
      %24 = vsyncadd [#allocation7], %s23
      %s25 = sshll.u32 [#allocation6], 4
      %s26 = int_to_ptr.vmem [resolvable:$true] %s25
      %31 = dma.hbm_to_vmem [thread:$0]  %s1, 2048, %s26, [#allocation7], 128, 128, 8
    $region9: #{custom_model_forward.1} parent=1 // pred_fallthru
      _
    // Predicated region
    $region10: #{custom_model_forward.1} parent=1 // pred_check
      _
    $region11: #{custom_model_forward.1} parent=1 // pred_check_branch
      %33 = sbr.rel (0) target = $region13
    $region12: #{custom_model_forward.1} parent=1 // pred_region
      %34 = dma.done [#allocation4], 128
    $region13: #{custom_model_forward.1} parent=1 // pred_fallthru
      _
    // Predicated region
    $region14: #{custom_model_forward.1} parent=1 // pred_check
      _
    $region15: #{custom_model_forward.1} parent=1 // pred_check_branch
      %36 = sbr.rel (0) target = $region17
    $region16: #{custom_model_forward.1} parent=1 // pred_region
      %37 = dma.done [#allocation7], 2048
    $region17: #{custom_model_forward.1} parent=1 // pred_fallthru
      _
    %38 = vst [vmem:[#allocation2] sm:$0xff] 0.0
    %v39 = vld [vmem:[#allocation3] sm:$0xff]
    %vm40 = vcmask 818176
    %41 = vst.msk [vmem:[#allocation2] sm:$0xff] %vm40, %v39
    %v42 = vld [vmem:[#allocation2] sm:$0xff]
    %v43 = vld [vmem:[#allocation6] sm:$0xff]
    %v44 = vld [vmem:[#allocation6 + $0x8] sm:$0xff]
    %v45 = vld [vmem:[#allocation6 + $0x10] sm:$0xff]
    %v46 = vld [vmem:[#allocation6 + $0x18] sm:$0xff]
    %v47 = vld [vmem:[#allocation6 + $0x20] sm:$0xff]
    %v48 = vld [vmem:[#allocation6 + $0x28] sm:$0xff]
    %v49 = vld [vmem:[#allocation6 + $0x30] sm:$0xff]
    %v50 = vld [vmem:[#allocation6 + $0x38] sm:$0xff]
    %v51 = vld [vmem:[#allocation6 + $0x40] sm:$0xff]
    %v52 = vld [vmem:[#allocation6 + $0x48] sm:$0xff]
    %v53 = vld [vmem:[#allocation6 + $0x50] sm:$0xff]
    %v54 = vld [vmem:[#allocation6 + $0x58] sm:$0xff]
    %v55 = vld [vmem:[#allocation6 + $0x60] sm:$0xff]
    %v56 = vld [vmem:[#allocation6 + $0x68] sm:$0xff]
    %v57 = vld [vmem:[#allocation6 + $0x70] sm:$0xff]
    %v58 = vld [vmem:[#allocation6 + $0x78] sm:$0xff]
    %59 = vmatprep.subr.mxu0 0.0
    %60 = vmatpush1.msra.mxu0 %v58
    %61 = vmatprep.subr.mxu0 0.0
    %62 = vmatpush1.msra.mxu0 %v57
    %63 = vmatprep.subr.mxu0 0.0
    %64 = vmatpush1.msra.mxu0 %v56
    %65 = vmatprep.subr.mxu0 0.0
    %66 = vmatpush1.msra.mxu0 %v55
    %67 = vmatprep.subr.mxu0 0.0
    %68 = vmatpush1.msra.mxu0 %v54
    %69 = vmatprep.subr.mxu0 0.0
    %70 = vmatpush1.msra.mxu0 %v53
    %71 = vmatprep.subr.mxu0 0.0
    %72 = vmatpush1.msra.mxu0 %v52
    %73 = vmatprep.subr.mxu0 0.0
    %74 = vmatpush1.msra.mxu0 %v51
    %75 = vmatprep.subr.mxu0 0.0
    %76 = vmatpush1.msra.mxu0 %v50
    %77 = vmatprep.subr.mxu0 0.0
    %78 = vmatpush1.msra.mxu0 %v49
    %79 = vmatprep.subr.mxu0 0.0
    %80 = vmatpush1.msra.mxu0 %v48
    %81 = vmatprep.subr.mxu0 0.0
    %82 = vmatpush1.msra.mxu0 %v47
    %83 = vmatprep.subr.mxu0 0.0
    %84 = vmatpush1.msra.mxu0 %v46
    %85 = vmatprep.subr.mxu0 0.0
    %86 = vmatpush1.msra.mxu0 %v45
    %87 = vmatprep.subr.mxu0 0.0
    %88 = vmatpush1.msra.mxu0 %v44
    %89 = vmatprep.subr.mxu0 0.0
    %90 = vmatpush1.msra.mxu0 %v43
    %91 = vmatprep.subr.mxu0 0.0
    %92 = vmatpush2.msra.mxu0 0.0
    %93 = vmatprep.subr.mxu0 0.0
    %94 = vmatpush2.msra.mxu0 0.0
    %95 = vmatprep.subr.mxu0 0.0
    %96 = vmatpush2.msra.mxu0 0.0
    %97 = vmatprep.subr.mxu0 0.0
    %98 = vmatpush2.msra.mxu0 0.0
    %99 = vmatprep.subr.mxu0 0.0
    %100 = vmatpush2.msra.mxu0 0.0
    %101 = vmatprep.subr.mxu0 0.0
    %102 = vmatpush2.msra.mxu0 0.0
    %103 = vmatprep.subr.mxu0 0.0
    %104 = vmatpush2.msra.mxu0 0.0
    %105 = vmatprep.subr.mxu0 0.0
    %106 = vmatpush2.msra.mxu0 0.0
    %107 = vmatprep.subr.mxu0 0.0
    %108 = vmatpush2.msra.mxu0 0.0
    %109 = vmatprep.subr.mxu0 0.0
    %110 = vmatpush2.msra.mxu0 0.0
    %111 = vmatprep.subr.mxu0 0.0
    %112 = vmatpush2.msra.mxu0 0.0
    %113 = vmatprep.subr.mxu0 0.0
    %114 = vmatpush2.msra.mxu0 0.0
    %115 = vmatprep.subr.mxu0 0.0
    %116 = vmatpush2.msra.mxu0 0.0
    %117 = vmatprep.subr.mxu0 0.0
    %118 = vmatpush2.msra.mxu0 0.0
    %119 = vmatprep.subr.mxu0 0.0
    %120 = vmatpush2.msra.mxu0 0.0
    %121 = vmatprep.subr.mxu0 0.0
    %122 = vmatpush2.msra.mxu0 0.0
    %123 = vmatprep.mubr.f32.mxu0 0.0
    %124 = vmatmul.mubr.f32.gmra.mxu0 %v42
    %v125 = vpop.f32.mrf.mxu0
    %v126 = vadd.f32 0.0, %v125
    %v127 = vpop.f32.mrf.mxu0
    %128 = vdwg.mxu0
    %129 = vst.msk [vmem:[#allocation8] sm:$0xff] %vm40, %v126
    // Predicated region
    $region18: #{custom_model_forward.1} parent=1 // pred_check
      _
    $region19: #{custom_model_forward.1} parent=1 // pred_check_branch
      %131 = sbr.rel (0) target = $region21
    $region20: #{custom_model_forward.1} parent=1 // pred_region
      %s133 = ssub.s32 128, 128
      %134 = vsyncadd [#allocation5], %s133
      %s136 = sshll.u32 [#allocation8], 4
      %s137 = int_to_ptr.vmem [resolvable:$true] %s136
      %139 = dma.vmem_to_hbm [thread:$0]  %s137, 128, %s2, [#allocation5]
    $region21: #{custom_model_forward.1} parent=1 // pred_fallthru
      _
    // Predicated region
    $region22: #{custom_model_forward.1} parent=1 // pred_check
      _
    $region23: #{custom_model_forward.1} parent=1 // pred_check_branch
      %141 = sbr.rel (0) target = $region25
    $region24: #{custom_model_forward.1} parent=1 // pred_region
      %142 = dma.done [#allocation5], 128
    $region25: #{custom_model_forward.1} parent=1 // pred_fallthru
      _
    %143 = vsyncpa [#allocation4], 1
    %144 = vsyncpa [#allocation7], 1
    %145 = vsyncpa [#allocation5], 1

</llo_original>
